<compile_context>
chip_gen: v7x
topology: tpu7x:2x2x1
jax: 0.10.0
libtpu: 0.0.40
codegen_flags: <defaults>
</compile_context>

<pallas_src>
import jax
import jax.numpy as jnp
from jax.experimental import pallas as pl
from jax.experimental.pallas import tpu as pltpu

LANE = 128
BF16_SUBLANE = 16   # native bf16 vreg tile is (16, 128)


def _round_up(x, m):
    return (x + m - 1) // m * m


def _device_vmem_bytes():
    """Physical VMEM capacity of the local TPU (per TensorCore on v7x)."""
    try:
        return int(pltpu.get_tpu_info().vmem_capacity_bytes)
    except Exception:
        return 64 << 20   # conservative fallback (v7x per-TC VMEM)


def _block_spec(shape, index_map, buffers=None):
    """BlockSpec with an optional explicit pipeline buffer count."""
    if buffers is None:
        return pl.BlockSpec(shape, index_map)
    try:
        return pl.BlockSpec(shape, index_map, pipeline_mode=pl.Buffered(buffers))
    except Exception:
        # Perf hint only; fall back to the default pipelining if unsupported.
        return pl.BlockSpec(shape, index_map)


# --------------------------------------------------------------------------- #
# Kernel
# --------------------------------------------------------------------------- #
def prmo_kernel(mut_ref, omics_ref,
                w_enc_ref, b_enc_ref,
                w_mut_ref, w_omics_ref, b_out_ref,
                o_ref):
    # --- Drugcell (approx): mut_out = tanh(mut_x @ W_enc + b_enc) ---
    mut_pre = jnp.dot(mut_ref[...], w_enc_ref[...],
                      preferred_element_type=jnp.float32) + b_enc_ref[...]
    # Cast back to the MXU compute dtype (bf16) for the second-stage matmul.
    mut_out = jnp.tanh(mut_pre).astype(w_mut_ref.dtype)

    # --- out_fc over concat(mut_out, [rna_x, pathway_x]) : 2 fused dots ---
    acc = jnp.dot(mut_out, w_mut_ref[...], preferred_element_type=jnp.float32)
    acc = acc + jnp.dot(omics_ref[...], w_omics_ref[...],
                        preferred_element_type=jnp.float32)
    o_ref[...] = (acc + b_out_ref[...]).astype(o_ref.dtype)


# --------------------------------------------------------------------------- #
# Parameter preparation (offline): merge rna+pathway weight blocks, pad every
# contraction dim and d_model to lane multiples (exact: zero padding), and cast
# weights to the MXU-native compute dtype (bf16). Biases stay f32.
# --------------------------------------------------------------------------- #
def prepare_kernel_params(params, compute_dtype=jnp.bfloat16):
    w_enc, b_enc = params["w_enc"], params["b_enc"]
    w_mut, w_rna = params["w_out_mut"], params["w_out_rna"]
    w_path, b_out = params["w_out_path"], params["b_out"]

    mut_dim, dc_d = w_enc.shape
    rna_dim, path_dim = w_rna.shape[0], w_path.shape[0]
    d_model = b_out.shape[-1]

    mut_p = _round_up(mut_dim, LANE)
    dc_p = _round_up(dc_d, LANE)
    omics_dim = rna_dim + path_dim
    omics_p = _round_up(omics_dim, LANE)
    dm_p = _round_up(d_model, LANE)

    def pad2(x, r, c):
        return jnp.pad(x, ((0, r - x.shape[0]), (0, c - x.shape[1])))

    w_omics = jnp.concatenate((w_rna, w_path), axis=0)   # rows match activation concat

    return dict(
        w_enc=pad2(w_enc, mut_p, dc_p).astype(compute_dtype),
        b_enc=pad2(b_enc, 1, dc_p).astype(jnp.float32),
        w_out_mut=pad2(w_mut, dc_p, dm_p).astype(compute_dtype),
        w_out_omics=pad2(w_omics, omics_p, dm_p).astype(compute_dtype),
        b_out=pad2(b_out, 1, dm_p).astype(jnp.float32),
        dims=dict(mut_dim=mut_dim, mut_p=mut_p, dc_p=dc_p,
                  omics_dim=omics_dim, omics_p=omics_p,
                  d_model=d_model, dm_p=dm_p),
    )


# --------------------------------------------------------------------------- #
# Wrapper
# --------------------------------------------------------------------------- #
def prmo_encoder(mut_x, rna_x, pathway_x, kparams, *,
                 batch_tile=None, act_buffers=None, out_dtype=jnp.bfloat16):
    dims = kparams["dims"]
    mut_p, dc_p = dims["mut_p"], dims["dc_p"]
    omics_p, dm_p, d_model = dims["omics_p"], dims["dm_p"], dims["d_model"]
    compute_dtype = kparams["w_enc"].dtype

    dev_vmem = _device_vmem_bytes()
    big_vmem = dev_vmem > (64 << 20)          # v5e / v6e (128 MiB) vs v7x (64 MiB/TC)
    if batch_tile is None:
        batch_tile = 512 if big_vmem else 256
    if act_buffers is None:
        act_buffers = 3 if big_vmem else 2

    B = mut_x.shape[0]
    tb = min(_round_up(batch_tile, BF16_SUBLANE), _round_up(B, BF16_SUBLANE))
    pB = _round_up(B, tb)
    # v7x has 2 TensorCores: give the "parallel" batch axis >=2 steps when the
    # batch is large enough to split.
    if pB // tb < 2 and tb > BF16_SUBLANE:
        tb = max(BF16_SUBLANE, _round_up(tb // 2, BF16_SUBLANE))
        pB = _round_up(B, tb)
    grid = (pB // tb,)

    def pad_act(x, feat_p):
        x = x.astype(compute_dtype)
        return jnp.pad(x, ((0, pB - x.shape[0]), (0, feat_p - x.shape[1])))

    mut_pad = pad_act(mut_x, mut_p)
    omics_pad = pad_act(jnp.concatenate((rna_x, pathway_x), axis=-1), omics_p)

    in_specs = [
        # Streamed activation tiles (multi-buffered).
        _block_spec((tb, mut_p), lambda i: (i, 0), act_buffers),
        _block_spec((tb, omics_p), lambda i: (i, 0), act_buffers),
        # Resident weights/biases: constant index_map + single buffer.
        _block_spec((mut_p, dc_p), lambda i: (0, 0), 1),
        _block_spec((1, dc_p), lambda i: (0, 0), 1),
        _block_spec((dc_p, dm_p), lambda i: (0, 0), 1),
        _block_spec((omics_p, dm_p), lambda i: (0, 0), 1),
        _block_spec((1, dm_p), lambda i: (0, 0), 1),
    ]
    out_specs = pl.BlockSpec((tb, dm_p), lambda i: (i, 0))

    # VMEM budget: single-buffered weights + multi-buffered activation tiles
    # + double-buffered output tile + headroom; clamped to device capacity.
    itm = jnp.dtype(compute_dtype).itemsize
    out_itm = jnp.dtype(out_dtype).itemsize
    weight_bytes = ((mut_p * dc_p + dc_p * dm_p + omics_p * dm_p) * itm
                    + (dc_p + dm_p) * 4)
    act_tile_bytes = tb * (mut_p + omics_p) * itm
    out_tile_bytes = tb * dm_p * out_itm
    needed = (weight_bytes + act_buffers * act_tile_bytes
              + 2 * out_tile_bytes + (4 << 20))
    vmem_limit = int(min(max(needed, 16 << 20), dev_vmem - (4 << 20)))

    flops = 2 * pB * (mut_p * dc_p + (dc_p + omics_p) * dm_p)
    cost = pl.CostEstimate(
        flops=int(flops),
        transcendentals=int(pB * dc_p),
        bytes_accessed=int(weight_bytes
                           + pB * (mut_p + omics_p) * itm
                           + pB * dm_p * out_itm))

    out = pl.pallas_call(
        prmo_kernel,
        out_shape=jax.ShapeDtypeStruct((pB, dm_p), out_dtype),
        grid=grid,
        in_specs=in_specs,
        out_specs=out_specs,
        compiler_params=pltpu.CompilerParams(
            dimension_semantics=("parallel",),
            vmem_limit_bytes=vmem_limit),
        cost_estimate=cost,
    )(mut_pad, omics_pad,
      kparams["w_enc"], kparams["b_enc"],
      kparams["w_out_mut"], kparams["w_out_omics"], kparams["b_out"])
    return out[:B, :d_model]


# --------------------------------------------------------------------------- #
# Synthetic parameters + pure-JAX reference
# --------------------------------------------------------------------------- #
def make_params(key, *, mut_dim, rna_dim, pathway_dim, dc_d_model, d_model):
    ks = jax.random.split(key, 4)
    hidden = dc_d_model + rna_dim + pathway_dim
    w_enc = jax.random.normal(ks[0], (mut_dim, dc_d_model), jnp.float32) * 0.05
    b_enc = jax.random.normal(ks[1], (1, dc_d_model), jnp.float32) * 0.05
    w_out = jax.random.normal(ks[2], (hidden, d_model), jnp.float32) * 0.05
    b_out = jax.random.normal(ks[3], (1, d_model), jnp.float32) * 0.05
    # Split out_fc weight by the concat segments: (mut_out, rna_x, pathway_x).
    return dict(w_enc=w_enc, b_enc=b_enc,
                w_out_mut=w_out[:dc_d_model],
                w_out_rna=w_out[dc_d_model:dc_d_model + rna_dim],
                w_out_path=w_out[dc_d_model + rna_dim:],
                b_out=b_out, w_out_full=w_out)


def reference(mut_x, rna_x, pathway_x, params):
    mut_out = jnp.tanh(mut_x @ params["w_enc"] + params["b_enc"])
    x = jnp.concatenate((mut_out, rna_x, pathway_x), axis=-1)
    return x @ params["w_out_full"] + params["b_out"]


if __name__ == "__main__":
    # Small shapes consistent with the module (scaled down from the defaults
    # d_model=768, mut_dim=3008, rna_dim=5537, pathway_dim=3793).
    B = 2
    mut_dim, rna_dim, pathway_dim = 64, 48, 40
    dc_d_model, d_model = 16, 32

    key = jax.random.PRNGKey(0)
    k_mut, k_rna, k_path, k_par = jax.random.split(key, 4)
    mut_x = jax.random.normal(k_mut, (B, mut_dim), jnp.float32)
    rna_x = jax.random.normal(k_rna, (B, rna_dim), jnp.float32)
    pathway_x = jax.random.normal(k_path, (B, pathway_dim), jnp.float32)

    params = make_params(k_par, mut_dim=mut_dim, rna_dim=rna_dim,
                         pathway_dim=pathway_dim, dc_d_model=dc_d_model,
                         d_model=d_model)
    kparams = prepare_kernel_params(params)

    out = prmo_encoder(mut_x, rna_x, pathway_x, kparams)
    out = jax.block_until_ready(out)

    ref = reference(mut_x, rna_x, pathway_x, params)
    assert out.shape == (B, d_model), out.shape
    # bf16 weights/activations/output with f32 accumulation -> loose tolerance.
    out_f32 = out.astype(jnp.float32)
    max_err = float(jnp.max(jnp.abs(out_f32 - ref)))
    assert jnp.allclose(out_f32, ref, atol=5e-2, rtol=5e-2), f"mismatch: {max_err}"

    print("KERNEL_OK")
</pallas_src>

<mosaic_0001>
module attributes {stable_mosaic.version = 11 : i64} {
  func.func @prmo_kernel(%arg0: i32, %arg1: memref<16x128xbf16, #tpu.memory_space<vmem>>, %arg2: memref<16x128xbf16, #tpu.memory_space<vmem>>, %arg3: memref<128x128xbf16, #tpu.memory_space<vmem>>, %arg4: memref<1x128xf32, #tpu.memory_space<vmem>>, %arg5: memref<128x128xbf16, #tpu.memory_space<vmem>>, %arg6: memref<128x128xbf16, #tpu.memory_space<vmem>>, %arg7: memref<1x128xf32, #tpu.memory_space<vmem>>, %arg8: memref<16x128xbf16, #tpu.memory_space<vmem>>) attributes {dimension_semantics = [#tpu.dimension_semantics<parallel>], iteration_bounds = array<i64: 1>, scalar_prefetch = 0 : i64, scratch_operands = 0 : i64, tpu.core_type = #tpu.core_type<tc>, window_params = [{pipeline_mode = #tpu.pipeline_mode<double_buffered>, transform_indices = @transform_0, window_bounds = array<i64: 16, 128>}, {pipeline_mode = #tpu.pipeline_mode<double_buffered>, transform_indices = @transform_1, window_bounds = array<i64: 16, 128>}, {pipeline_mode = #tpu.pipeline_mode<synchronous>, transform_indices = @transform_2, window_bounds = array<i64: 128, 128>}, {pipeline_mode = #tpu.pipeline_mode<synchronous>, transform_indices = @transform_3, window_bounds = array<i64: 1, 128>}, {pipeline_mode = #tpu.pipeline_mode<synchronous>, transform_indices = @transform_4, window_bounds = array<i64: 128, 128>}, {pipeline_mode = #tpu.pipeline_mode<synchronous>, transform_indices = @transform_5, window_bounds = array<i64: 128, 128>}, {pipeline_mode = #tpu.pipeline_mode<synchronous>, transform_indices = @transform_6, window_bounds = array<i64: 1, 128>}, {transform_indices = @transform_7, window_bounds = array<i64: 16, 128>}]} {
    %c0 = arith.constant 0 : index
    %c0_0 = arith.constant 0 : index
    %0 = vector.load %arg1[%c0, %c0_0] : memref<16x128xbf16, #tpu.memory_space<vmem>>, vector<16x128xbf16>
    %c0_1 = arith.constant 0 : index
    %c0_2 = arith.constant 0 : index
    %1 = vector.load %arg3[%c0_1, %c0_2] : memref<128x128xbf16, #tpu.memory_space<vmem>>, vector<128x128xbf16>
    %cst = arith.constant dense<0.000000e+00> : vector<16x128xf32>
    %2 = tpu.matmul %0, %1, %cst {dimension_numbers = #tpu.dot_dimension_numbers<[1], [0], [0], [1], [0, 0, 1, 1], [], []>} : vector<16x128xbf16>, vector<128x128xbf16>, vector<16x128xf32> -> vector<16x128xf32>
    %c0_3 = arith.constant 0 : index
    %c0_4 = arith.constant 0 : index
    %3 = vector.load %arg4[%c0_3, %c0_4] : memref<1x128xf32, #tpu.memory_space<vmem>>, vector<1x128xf32>
    %4 = vector.broadcast %3 : vector<1x128xf32> to vector<16x128xf32>
    %5 = arith.addf %2, %4 : vector<16x128xf32>
    %6 = math.tanh %5 : vector<16x128xf32>
    %7 = arith.truncf %6 : vector<16x128xf32> to vector<16x128xbf16>
    %c0_5 = arith.constant 0 : index
    %c0_6 = arith.constant 0 : index
    %8 = vector.load %arg5[%c0_5, %c0_6] : memref<128x128xbf16, #tpu.memory_space<vmem>>, vector<128x128xbf16>
    %cst_7 = arith.constant dense<0.000000e+00> : vector<16x128xf32>
    %9 = tpu.matmul %7, %8, %cst_7 {dimension_numbers = #tpu.dot_dimension_numbers<[1], [0], [0], [1], [0, 0, 1, 1], [], []>} : vector<16x128xbf16>, vector<128x128xbf16>, vector<16x128xf32> -> vector<16x128xf32>
    %c0_8 = arith.constant 0 : index
    %c0_9 = arith.constant 0 : index
    %10 = vector.load %arg2[%c0_8, %c0_9] : memref<16x128xbf16, #tpu.memory_space<vmem>>, vector<16x128xbf16>
    %c0_10 = arith.constant 0 : index
    %c0_11 = arith.constant 0 : index
    %11 = vector.load %arg6[%c0_10, %c0_11] : memref<128x128xbf16, #tpu.memory_space<vmem>>, vector<128x128xbf16>
    %cst_12 = arith.constant dense<0.000000e+00> : vector<16x128xf32>
    %12 = tpu.matmul %10, %11, %cst_12 {dimension_numbers = #tpu.dot_dimension_numbers<[1], [0], [0], [1], [0, 0, 1, 1], [], []>} : vector<16x128xbf16>, vector<128x128xbf16>, vector<16x128xf32> -> vector<16x128xf32>
    %13 = arith.addf %9, %12 : vector<16x128xf32>
    %c0_13 = arith.constant 0 : index
    %c0_14 = arith.constant 0 : index
    %14 = vector.load %arg7[%c0_13, %c0_14] : memref<1x128xf32, #tpu.memory_space<vmem>>, vector<1x128xf32>
    %15 = vector.broadcast %14 : vector<1x128xf32> to vector<16x128xf32>
    %16 = arith.addf %13, %15 : vector<16x128xf32>
    %17 = arith.truncf %16 : vector<16x128xf32> to vector<16x128xbf16>
    %c0_15 = arith.constant 0 : index
    %c0_16 = arith.constant 0 : index
    %18 = vector.load %arg8[%c0_15, %c0_16] : memref<16x128xbf16, #tpu.memory_space<vmem>>, vector<16x128xbf16>
    tpu.vector_store %arg8[%c0_15, %c0_16], %17 {strides = array<i32>} : memref<16x128xbf16, #tpu.memory_space<vmem>>, vector<16x128xbf16>,
    return
  }
  func.func @transform_0(%arg0: i32) -> (i32, i32) {
    %c0_i32 = arith.constant 0 : i32
    %c0_i32_0 = arith.constant 0 : i32
    return %arg0, %c0_i32 : i32, i32
  }
  func.func @transform_1(%arg0: i32) -> (i32, i32) {
    %c0_i32 = arith.constant 0 : i32
    %c0_i32_0 = arith.constant 0 : i32
    return %arg0, %c0_i32 : i32, i32
  }
  func.func @transform_2(%arg0: i32) -> (i32, i32) {
    %c0_i32 = arith.constant 0 : i32
    %c0_i32_0 = arith.constant 0 : i32
    %c0_i32_1 = arith.constant 0 : i32
    return %c0_i32, %c0_i32_0 : i32, i32
  }
  func.func @transform_3(%arg0: i32) -> (i32, i32) {
    %c0_i32 = arith.constant 0 : i32
    %c0_i32_0 = arith.constant 0 : i32
    %c0_i32_1 = arith.constant 0 : i32
    return %c0_i32, %c0_i32_0 : i32, i32
  }
  func.func @transform_4(%arg0: i32) -> (i32, i32) {
    %c0_i32 = arith.constant 0 : i32
    %c0_i32_0 = arith.constant 0 : i32
    %c0_i32_1 = arith.constant 0 : i32
    return %c0_i32, %c0_i32_0 : i32, i32
  }
  func.func @transform_5(%arg0: i32) -> (i32, i32) {
    %c0_i32 = arith.constant 0 : i32
    %c0_i32_0 = arith.constant 0 : i32
    %c0_i32_1 = arith.constant 0 : i32
    return %c0_i32, %c0_i32_0 : i32, i32
  }
  func.func @transform_6(%arg0: i32) -> (i32, i32) {
    %c0_i32 = arith.constant 0 : i32
    %c0_i32_0 = arith.constant 0 : i32
    %c0_i32_1 = arith.constant 0 : i32
    return %c0_i32, %c0_i32_0 : i32, i32
  }
  func.func @transform_7(%arg0: i32) -> (i32, i32) {
    %c0_i32 = arith.constant 0 : i32
    %c0_i32_0 = arith.constant 0 : i32
    return %arg0, %c0_i32 : i32, i32
  }
}

</mosaic_0001>

<llo_original>
// kernel: tpu_custom_call.1
$region0: #{tpu_custom_call.1}
  #allocation0 [shape = 'u32[]', space=smem, size = 0x4, offset = 0x4, fixed_abs, tag = 'smem constant byte address 0x4 - core index']
  #allocation1 [shape = 'u32[144,128]{1,0:T(1,128)}', space=vmem, size = 0x12000, scoped, tag = 'internal scratch']
  %s0 = inlined_call_operand.hbm [shape: bf16[16,128], index: 0, kind: input, shape index: {}]
  %s1 = inlined_call_operand.hbm [shape: bf16[16,128], index: 1, kind: input, shape index: {}]
  %s2 = inlined_call_operand.hbm [shape: bf16[128,128], index: 2, kind: input, shape index: {}]
  %s3 = inlined_call_operand.vmem [shape: f32[1,128], index: 3, kind: input, shape index: {}]
  %s4 = inlined_call_operand.hbm [shape: bf16[128,128], index: 4, kind: input, shape index: {}]
  %s5 = inlined_call_operand.hbm [shape: bf16[128,128], index: 5, kind: input, shape index: {}]
  %s6 = inlined_call_operand.vmem [shape: f32[1,128], index: 6, kind: input, shape index: {}]
  %s7 = inlined_call_operand.hbm [shape: bf16[16,128], index: 7, kind: output, shape index: {}]
  %s8 = sld [smem:[#allocation0]]
  $region58: #{tpu_custom_call.1} parent=0
    _
  %s10 = ssub.s32 1, %s8
  %s11 = scalar_select 0, %s10, %s8
  $region1: #{tpu_custom_call.1} parent=0
    #allocation2 [shape = 'u8[4096]{0}', space=vmem, size = 0x1000, scoped, tag = 'input window, operand 0, single buffered']
    #allocation3 [shape = 's32[1]{0}', space=sflag, size = 0x4, scoped, tag = 'scoped memory for tpu_custom_call.1']
    #allocation4 [shape = 's32[1]{0}', space=sflag, size = 0x4, scoped, tag = 'scoped memory for tpu_custom_call.1']
    #allocation5 [shape = 'u8[4096]{0}', space=vmem, size = 0x1000, scoped, tag = 'input window, operand 1, single buffered']
    #allocation6 [shape = 's32[1]{0}', space=sflag, size = 0x4, scoped, tag = 'scoped memory for tpu_custom_call.1']
    #allocation7 [shape = 'u8[32768]{0}', space=vmem, size = 0x8000, scoped, tag = 'input window, operand 2, single buffered']
    #allocation8 [shape = 'u8[32768]{0}', space=vmem, size = 0x8000, scoped, tag = 'input window, operand 4, single buffered']
    #allocation9 [shape = 's32[1]{0}', space=sflag, size = 0x4, scoped, tag = 'scoped memory for tpu_custom_call.1']
    #allocation10 [shape = 'u8[32768]{0}', space=vmem, size = 0x8000, scoped, tag = 'input window, operand 5, single buffered']
    #allocation11 [shape = 'u8[4096]{0}', space=vmem, size = 0x1000, scoped, tag = 'output window, operand 0, single buffered']
    %12 = vsyncpa [#allocation3], 0
    %13 = vsyncpa [#allocation6], 0
    %14 = vsyncpa [#allocation9], 0
    %15 = vsyncpa [#allocation4], 0
    // Predicated region
    $region2: #{tpu_custom_call.1} parent=1 // pred_check
      _
    $region3: #{tpu_custom_call.1} parent=1 // pred_check_branch
      %17 = sbr.rel (0) target = $region5
    $region4: #{tpu_custom_call.1} parent=1 // pred_region
      %s19 = ssub.s32 128, 128
      %20 = vsyncadd [#allocation3], %s19
      %s21 = sshll.u32 [#allocation2], 4
      %s22 = int_to_ptr.vmem [resolvable:$true] %s21
      %27 = dma.hbm_to_vmem [thread:$0]  %s0, 128, %s22, [#allocation3], 64, 64, 4
    $region5: #{tpu_custom_call.1} parent=1 // pred_fallthru
      _
    // Predicated region
    $region6: #{tpu_custom_call.1} parent=1 // pred_check
      _
    $region7: #{tpu_custom_call.1} parent=1 // pred_check_branch
      %29 = sbr.rel (0) target = $region9
    $region8: #{tpu_custom_call.1} parent=1 // pred_region
      %s31 = ssub.s32 128, 128
      %32 = vsyncadd [#allocation6], %s31
      %s33 = sshll.u32 [#allocation5], 4
      %s34 = int_to_ptr.vmem [resolvable:$true] %s33
      %39 = dma.hbm_to_vmem [thread:$0]  %s1, 128, %s34, [#allocation6], 64, 64, 4
    $region9: #{tpu_custom_call.1} parent=1 // pred_fallthru
      _
    // Predicated region
    $region10: #{tpu_custom_call.1} parent=1 // pred_check
      _
    $region11: #{tpu_custom_call.1} parent=1 // pred_check_branch
      %41 = sbr.rel (0) target = $region13
    $region12: #{tpu_custom_call.1} parent=1 // pred_region
      %s43 = ssub.s32 1024, 1024
      %44 = vsyncadd [#allocation6], %s43
      %s45 = sshll.u32 [#allocation7], 4
      %s46 = int_to_ptr.vmem [resolvable:$true] %s45
      %51 = dma.hbm_to_vmem [thread:$0]  %s2, 1024, %s46, [#allocation6], 64, 64, 4
    $region13: #{tpu_custom_call.1} parent=1 // pred_fallthru
      _
    // Predicated region
    $region14: #{tpu_custom_call.1} parent=1 // pred_check
      _
    $region15: #{tpu_custom_call.1} parent=1 // pred_check_branch
      %53 = sbr.rel (0) target = $region17
    $region16: #{tpu_custom_call.1} parent=1 // pred_region
      _
    $region17: #{tpu_custom_call.1} parent=1 // pred_fallthru
      _
    // Predicated region
    $region18: #{tpu_custom_call.1} parent=1 // pred_check
      _
    $region19: #{tpu_custom_call.1} parent=1 // pred_check_branch
      %55 = sbr.rel (0) target = $region21
    $region20: #{tpu_custom_call.1} parent=1 // pred_region
      %s57 = ssub.s32 1024, 1024
      %58 = vsyncadd [#allocation9], %s57
      %s59 = sshll.u32 [#allocation8], 4
      %s60 = int_to_ptr.vmem [resolvable:$true] %s59
      %65 = dma.hbm_to_vmem [thread:$0]  %s4, 1024, %s60, [#allocation9], 64, 64, 4
    $region21: #{tpu_custom_call.1} parent=1 // pred_fallthru
      _
    // Predicated region
    $region22: #{tpu_custom_call.1} parent=1 // pred_check
      _
    $region23: #{tpu_custom_call.1} parent=1 // pred_check_branch
      %67 = sbr.rel (0) target = $region25
    $region24: #{tpu_custom_call.1} parent=1 // pred_region
      %s69 = ssub.s32 1024, 1024
      %70 = vsyncadd [#allocation9], %s69
      %s71 = sshll.u32 [#allocation10], 4
      %s72 = int_to_ptr.vmem [resolvable:$true] %s71
      %77 = dma.hbm_to_vmem [thread:$0]  %s5, 1024, %s72, [#allocation9], 64, 64, 4
    $region25: #{tpu_custom_call.1} parent=1 // pred_fallthru
      _
    // Predicated region
    $region26: #{tpu_custom_call.1} parent=1 // pred_check
      _
    $region27: #{tpu_custom_call.1} parent=1 // pred_check_branch
      %79 = sbr.rel (0) target = $region29
    $region28: #{tpu_custom_call.1} parent=1 // pred_region
      _
    $region29: #{tpu_custom_call.1} parent=1 // pred_fallthru
      _
    // Predicated region
    $region30: #{tpu_custom_call.1} parent=1 // pred_check
      _
    $region31: #{tpu_custom_call.1} parent=1 // pred_check_branch
      %81 = sbr.rel (0) target = $region33
    $region32: #{tpu_custom_call.1} parent=1 // pred_region
      %82 = dma.done [#allocation3], 128
    $region33: #{tpu_custom_call.1} parent=1 // pred_fallthru
      _
    // Predicated region
    $region34: #{tpu_custom_call.1} parent=1 // pred_check
      _
    $region35: #{tpu_custom_call.1} parent=1 // pred_check_branch
      %84 = sbr.rel (0) target = $region37
    $region36: #{tpu_custom_call.1} parent=1 // pred_region
      %85 = dma.done [#allocation6], 128
    $region37: #{tpu_custom_call.1} parent=1 // pred_fallthru
      _
    // Predicated region
    $region38: #{tpu_custom_call.1} parent=1 // pred_check
      _
    $region39: #{tpu_custom_call.1} parent=1 // pred_check_branch
      %87 = sbr.rel (0) target = $region41
    $region40: #{tpu_custom_call.1} parent=1 // pred_region
      %88 = dma.done [#allocation6], 1024
    $region41: #{tpu_custom_call.1} parent=1 // pred_fallthru
      _
    // Predicated region
    $region42: #{tpu_custom_call.1} parent=1 // pred_check
      _
    $region43: #{tpu_custom_call.1} parent=1 // pred_check_branch
      %90 = sbr.rel (0) target = $region45
    $region44: #{tpu_custom_call.1} parent=1 // pred_region
      %91 = dma.done [#allocation9], 1024
    $region45: #{tpu_custom_call.1} parent=1 // pred_fallthru
      _
    // Predicated region
    $region46: #{tpu_custom_call.1} parent=1 // pred_check
      _
    $region47: #{tpu_custom_call.1} parent=1 // pred_check_branch
      %93 = sbr.rel (0) target = $region49
    $region48: #{tpu_custom_call.1} parent=1 // pred_region
      %94 = dma.done [#allocation9], 1024
    $region49: #{tpu_custom_call.1} parent=1 // pred_fallthru
      _
    %v96 = vld [vmem:[#allocation2] sm:$0xf]
    %v97 = vld [vmem:[#allocation2 + $0x4] sm:$0xf]
    %v98 = vld [vmem:[#allocation7] sm:$0xf]
    %v99 = vld [vmem:[#allocation7 + $0x4] sm:$0xf]
    %v100 = vld [vmem:[#allocation7 + $0x8] sm:$0xf]
    %v101 = vld [vmem:[#allocation7 + $0xc] sm:$0xf]
    %v102 = vld [vmem:[#allocation7 + $0x10] sm:$0xf]
    %v103 = vld [vmem:[#allocation7 + $0x14] sm:$0xf]
    %v104 = vld [vmem:[#allocation7 + $0x18] sm:$0xf]
    %v105 = vld [vmem:[#allocation7 + $0x1c] sm:$0xf]
    %v106 = vld [vmem:[#allocation7 + $0x20] sm:$0xf]
    %v107 = vld [vmem:[#allocation7 + $0x24] sm:$0xf]
    %v108 = vld [vmem:[#allocation7 + $0x28] sm:$0xf]
    %v109 = vld [vmem:[#allocation7 + $0x2c] sm:$0xf]
    %v110 = vld [vmem:[#allocation7 + $0x30] sm:$0xf]
    %v111 = vld [vmem:[#allocation7 + $0x34] sm:$0xf]
    %v112 = vld [vmem:[#allocation7 + $0x38] sm:$0xf]
    %v113 = vld [vmem:[#allocation7 + $0x3c] sm:$0xf]
    %v114 = vld [vmem:[%s3] sm:$0x1]
    %v116 = vlaneseq
    %v117 = vshrl.u32 %v116, 7
    %v118 = vsub.s32 0, %v117
    %v119 = vrot.slane %v114, %v118
    %v123 = vunpack.c.l.b16 %v96
    %v124 = vunpack.c.l.b16 %v97
    %v125 = vpack.c.b16 %v124, %v123
    %v143 = vunpack.c.l.b16 %v98
    %v144 = vunpack.c.l.b16 %v99
    %v145 = vunpack.c.l.b16 %v100
    %v146 = vunpack.c.l.b16 %v101
    %v147 = vunpack.c.l.b16 %v102
    %v148 = vunpack.c.l.b16 %v103
    %v149 = vunpack.c.l.b16 %v104
    %v150 = vunpack.c.l.b16 %v105
    %v151 = vunpack.c.l.b16 %v106
    %v152 = vunpack.c.l.b16 %v107
    %v153 = vunpack.c.l.b16 %v108
    %v154 = vunpack.c.l.b16 %v109
    %v155 = vunpack.c.l.b16 %v110
    %v156 = vunpack.c.l.b16 %v111
    %v157 = vunpack.c.l.b16 %v112
    %v158 = vunpack.c.l.b16 %v113
    %v159 = vpack.c.b16 %v144, %v143
    %v160 = vpack.c.b16 %v146, %v145
    %v161 = vpack.c.b16 %v148, %v147
    %v162 = vpack.c.b16 %v150, %v149
    %v163 = vpack.c.b16 %v152, %v151
    %v164 = vpack.c.b16 %v154, %v153
    %v165 = vpack.c.b16 %v156, %v155
    %v166 = vpack.c.b16 %v158, %v157
    %175 = vmatprep.subr.bf16.mxu0 0
    %176 = vmatpush1.bf16.msra.mxu0 %v159
    %177 = vmatprep.subr.bf16.mxu0 0
    %178 = vmatpush1.bf16.msra.mxu0 %v160
    %179 = vmatprep.subr.bf16.mxu0 0
    %180 = vmatpush1.bf16.msra.mxu0 %v161
    %181 = vmatprep.subr.bf16.mxu0 0
    %182 = vmatpush1.bf16.msra.mxu0 %v162
    %183 = vmatprep.subr.bf16.mxu0 0
    %184 = vmatpush1.bf16.msra.mxu0 %v163
    %185 = vmatprep.subr.bf16.mxu0 0
    %186 = vmatpush1.bf16.msra.mxu0 %v164
    %187 = vmatprep.subr.bf16.mxu0 0
    %188 = vmatpush1.bf16.msra.mxu0 %v165
    %189 = vmatprep.subr.bf16.mxu0 0
    %190 = vmatpush1.bf16.msra.mxu0 %v166
    %191 = vmatprep.subr.bf16.mxu0 0
    %192 = vmatpush1.bf16.msra.mxu0 0
    %193 = vmatprep.subr.bf16.mxu0 0
    %194 = vmatpush1.bf16.msra.mxu0 0
    %195 = vmatprep.subr.bf16.mxu0 0
    %196 = vmatpush1.bf16.msra.mxu0 0
    %197 = vmatprep.subr.bf16.mxu0 0
    %198 = vmatpush1.bf16.msra.mxu0 0
    %199 = vmatprep.subr.bf16.mxu0 0
    %200 = vmatpush1.bf16.msra.mxu0 0
    %201 = vmatprep.subr.bf16.mxu0 0
    %202 = vmatpush1.bf16.msra.mxu0 0
    %203 = vmatprep.subr.bf16.mxu0 0
    %204 = vmatpush1.bf16.msra.mxu0 0
    %205 = vmatprep.subr.bf16.mxu0 0
    %206 = vmatpush1.bf16.msra.mxu0 0
    %207 = vmatprep.mubr.bf16.mxu0 0
    %208 = vmatmul.mubr.bf16.gmra.mrb[0].mxu0 %v125
    %v209 = vpop.f32.mrb[0].mxu0
    %v210 = vadd.f32 %v119, %v209
    %v211 = vpop.f32.mrb[0].mxu0
    %v212 = vpop.f32.mrb[0].mxu0
    %v213 = vadd.f32 %v119, %v212
    %v214 = vpop.f32.mrb[0].mxu0
    %215 = vdwg.mxu0
    %v216 = vtanh.pop %v210
    %v217 = vtanh.pop %v213
    %v218 = vpack.c.bf16 %v217, %v216
    %v219 = vld [vmem:[#allocation8] sm:$0xf]
    %v220 = vld [vmem:[#allocation8 + $0x4] sm:$0xf]
    %v221 = vld [vmem:[#allocation8 + $0x8] sm:$0xf]
    %v222 = vld [vmem:[#allocation8 + $0xc] sm:$0xf]
    %v223 = vld [vmem:[#allocation8 + $0x10] sm:$0xf]
    %v224 = vld [vmem:[#allocation8 + $0x14] sm:$0xf]
    %v225 = vld [vmem:[#allocation8 + $0x18] sm:$0xf]
    %v226 = vld [vmem:[#allocation8 + $0x1c] sm:$0xf]
    %v227 = vld [vmem:[#allocation8 + $0x20] sm:$0xf]
    %v228 = vld [vmem:[#allocation8 + $0x24] sm:$0xf]
    %v229 = vld [vmem:[#allocation8 + $0x28] sm:$0xf]
    %v230 = vld [vmem:[#allocation8 + $0x2c] sm:$0xf]
    %v231 = vld [vmem:[#allocation8 + $0x30] sm:$0xf]
    %v232 = vld [vmem:[#allocation8 + $0x34] sm:$0xf]
    %v233 = vld [vmem:[#allocation8 + $0x38] sm:$0xf]
    %v234 = vld [vmem:[#allocation8 + $0x3c] sm:$0xf]
    %v235 = vld [vmem:[#allocation5] sm:$0xf]
    %v236 = vld [vmem:[#allocation5 + $0x4] sm:$0xf]
    %v237 = vld [vmem:[#allocation10] sm:$0xf]
    %v238 = vld [vmem:[#allocation10 + $0x4] sm:$0xf]
    %v239 = vld [vmem:[#allocation10 + $0x8] sm:$0xf]
    %v240 = vld [vmem:[#allocation10 + $0xc] sm:$0xf]
    %v241 = vld [vmem:[#allocation10 + $0x10] sm:$0xf]
    %v242 = vld [vmem:[#allocation10 + $0x14] sm:$0xf]
    %v243 = vld [vmem:[#allocation10 + $0x18] sm:$0xf]
    %v244 = vld [vmem:[#allocation10 + $0x1c] sm:$0xf]
    %v245 = vld [vmem:[#allocation10 + $0x20] sm:$0xf]
    %v246 = vld [vmem:[#allocation10 + $0x24] sm:$0xf]
    %v247 = vld [vmem:[#allocation10 + $0x28] sm:$0xf]
    %v248 = vld [vmem:[#allocation10 + $0x2c] sm:$0xf]
    %v249 = vld [vmem:[#allocation10 + $0x30] sm:$0xf]
    %v250 = vld [vmem:[#allocation10 + $0x34] sm:$0xf]
    %v251 = vld [vmem:[#allocation10 + $0x38] sm:$0xf]
    %v252 = vld [vmem:[#allocation10 + $0x3c] sm:$0xf]
    %v255 = vunpack.c.l.b16 %v235
    %v256 = vunpack.c.l.b16 %v236
    %v257 = vpack.c.b16 %v256, %v255
    %v275 = vunpack.c.l.b16 %v237
    %v276 = vunpack.c.l.b16 %v238
    %v277 = vunpack.c.l.b16 %v239
    %v278 = vunpack.c.l.b16 %v240
    %v279 = vunpack.c.l.b16 %v241
    %v280 = vunpack.c.l.b16 %v242
    %v281 = vunpack.c.l.b16 %v243
    %v282 = vunpack.c.l.b16 %v244
    %v283 = vunpack.c.l.b16 %v245
    %v284 = vunpack.c.l.b16 %v246
    %v285 = vunpack.c.l.b16 %v247
    %v286 = vunpack.c.l.b16 %v248
    %v287 = vunpack.c.l.b16 %v249
    %v288 = vunpack.c.l.b16 %v250
    %v289 = vunpack.c.l.b16 %v251
    %v290 = vunpack.c.l.b16 %v252
    %v291 = vpack.c.b16 %v276, %v275
    %v292 = vpack.c.b16 %v278, %v277
    %v293 = vpack.c.b16 %v280, %v279
    %v294 = vpack.c.b16 %v282, %v281
    %v295 = vpack.c.b16 %v284, %v283
    %v296 = vpack.c.b16 %v286, %v285
    %v297 = vpack.c.b16 %v288, %v287
    %v298 = vpack.c.b16 %v290, %v289
    %307 = vmatprep.subr.bf16.mxu0 0
    %308 = vmatpush1.bf16.msra.mxu0 %v291
    %309 = vmatprep.subr.bf16.mxu0 0
    %310 = vmatpush1.bf16.msra.mxu0 %v292
    %311 = vmatprep.subr.bf16.mxu0 0
    %312 = vmatpush1.bf16.msra.mxu0 %v293
    %313 = vmatprep.subr.bf16.mxu0 0
    %314 = vmatpush1.bf16.msra.mxu0 %v294
    %315 = vmatprep.subr.bf16.mxu0 0
    %316 = vmatpush1.bf16.msra.mxu0 %v295
    %317 = vmatprep.subr.bf16.mxu0 0
    %318 = vmatpush1.bf16.msra.mxu0 %v296
    %319 = vmatprep.subr.bf16.mxu0 0
    %320 = vmatpush1.bf16.msra.mxu0 %v297
    %321 = vmatprep.subr.bf16.mxu0 0
    %322 = vmatpush1.bf16.msra.mxu0 %v298
    %323 = vmatprep.subr.bf16.mxu0 0
    %324 = vmatpush1.bf16.msra.mxu0 0
    %325 = vmatprep.subr.bf16.mxu0 0
    %326 = vmatpush1.bf16.msra.mxu0 0
    %327 = vmatprep.subr.bf16.mxu0 0
    %328 = vmatpush1.bf16.msra.mxu0 0
    %329 = vmatprep.subr.bf16.mxu0 0
    %330 = vmatpush1.bf16.msra.mxu0 0
    %331 = vmatprep.subr.bf16.mxu0 0
    %332 = vmatpush1.bf16.msra.mxu0 0
    %333 = vmatprep.subr.bf16.mxu0 0
    %334 = vmatpush1.bf16.msra.mxu0 0
    %335 = vmatprep.subr.bf16.mxu0 0
    %336 = vmatpush1.bf16.msra.mxu0 0
    %337 = vmatprep.subr.bf16.mxu0 0
    %338 = vmatpush1.bf16.msra.mxu0 0
    %339 = vmatprep.mubr.bf16.mxu0 0
    %340 = vmatmul.mubr.bf16.gmra.mrb[0].mxu0 %v257
    %v341 = vpop.f32.mrb[0].mxu0
    %v342 = vadd.f32 0.0, %v341
    %v343 = vpop.f32.mrb[0].mxu0
    %v344 = vpop.f32.mrb[0].mxu0
    %v345 = vadd.f32 0.0, %v344
    %v346 = vpop.f32.mrb[0].mxu0
    %347 = vdwg.mxu0
    %v364 = vunpack.c.l.b16 %v219
    %v365 = vunpack.c.l.b16 %v220
    %v366 = vunpack.c.l.b16 %v221
    %v367 = vunpack.c.l.b16 %v222
    %v368 = vunpack.c.l.b16 %v223
    %v369 = vunpack.c.l.b16 %v224
    %v370 = vunpack.c.l.b16 %v225
    %v371 = vunpack.c.l.b16 %v226
    %v372 = vunpack.c.l.b16 %v227
    %v373 = vunpack.c.l.b16 %v228
    %v374 = vunpack.c.l.b16 %v229
    %v375 = vunpack.c.l.b16 %v230
    %v376 = vunpack.c.l.b16 %v231
    %v377 = vunpack.c.l.b16 %v232
    %v378 = vunpack.c.l.b16 %v233
    %v379 = vunpack.c.l.b16 %v234
    %v380 = vpack.c.b16 %v365, %v364
    %v381 = vpack.c.b16 %v367, %v366
    %v382 = vpack.c.b16 %v369, %v368
    %v383 = vpack.c.b16 %v371, %v370
    %v384 = vpack.c.b16 %v373, %v372
    %v385 = vpack.c.b16 %v375, %v374
    %v386 = vpack.c.b16 %v377, %v376
    %v387 = vpack.c.b16 %v379, %v378
    %396 = vmatprep.subr.bf16.mxu0 0
    %397 = vmatpush1.bf16.msra.mxu0 %v380
    %398 = vmatprep.subr.bf16.mxu0 0
    %399 = vmatpush1.bf16.msra.mxu0 %v381
    %400 = vmatprep.subr.bf16.mxu0 0
    %401 = vmatpush1.bf16.msra.mxu0 %v382
    %402 = vmatprep.subr.bf16.mxu0 0
    %403 = vmatpush1.bf16.msra.mxu0 %v383
    %404 = vmatprep.subr.bf16.mxu0 0
    %405 = vmatpush1.bf16.msra.mxu0 %v384
    %406 = vmatprep.subr.bf16.mxu0 0
    %407 = vmatpush1.bf16.msra.mxu0 %v385
    %408 = vmatprep.subr.bf16.mxu0 0
    %409 = vmatpush1.bf16.msra.mxu0 %v386
    %410 = vmatprep.subr.bf16.mxu0 0
    %411 = vmatpush1.bf16.msra.mxu0 %v387
    %412 = vmatprep.subr.bf16.mxu0 0
    %413 = vmatpush1.bf16.msra.mxu0 0
    %414 = vmatprep.subr.bf16.mxu0 0
    %415 = vmatpush1.bf16.msra.mxu0 0
    %416 = vmatprep.subr.bf16.mxu0 0
    %417 = vmatpush1.bf16.msra.mxu0 0
    %418 = vmatprep.subr.bf16.mxu0 0
    %419 = vmatpush1.bf16.msra.mxu0 0
    %420 = vmatprep.subr.bf16.mxu0 0
    %421 = vmatpush1.bf16.msra.mxu0 0
    %422 = vmatprep.subr.bf16.mxu0 0
    %423 = vmatpush1.bf16.msra.mxu0 0
    %424 = vmatprep.subr.bf16.mxu0 0
    %425 = vmatpush1.bf16.msra.mxu0 0
    %426 = vmatprep.subr.bf16.mxu0 0
    %427 = vmatpush1.bf16.msra.mxu0 0
    %428 = vmatprep.mubr.bf16.mxu0 0
    %429 = vmatmul.mubr.bf16.gmra.mrb[0].mxu0 %v218
    %v430 = vpop.f32.mrb[0].mxu0
    %v431 = vadd.f32 %v342, %v430
    %v432 = vpop.f32.mrb[0].mxu0
    %v433 = vpop.f32.mrb[0].mxu0
    %v434 = vadd.f32 %v345, %v433
    %v435 = vpop.f32.mrb[0].mxu0
    %436 = vdwg.mxu0
    %v437 = vld [vmem:[%s6] sm:$0x1]
    %v439 = vlaneseq
    %v440 = vshrl.u32 %v439, 7
    %v441 = vsub.s32 0, %v440
    %v442 = vrot.slane %v437, %v441
    %v444 = vadd.f32 %v431, %v442
    %v445 = vadd.f32 %v434, %v442
    %v446 = vpack.c.bf16 %v445, %v444
    %v448 = vunpack.c.l.b16 %v446
    %v449 = vunpack.c.h.b16 %v446
    %v450 = vpack.c.b16 %v448, %v448
    %v451 = vpack.c.b16 %v449, %v449
    %454 = vst [vmem:[#allocation11] sm:$0xf] %v450
    %455 = vst [vmem:[#allocation11 + $0x4] sm:$0xf] %v451
    // Predicated region
    $region50: #{tpu_custom_call.1} parent=1 // pred_check
      _
    $region51: #{tpu_custom_call.1} parent=1 // pred_check_branch
      %457 = sbr.rel (0) target = $region53
    $region52: #{tpu_custom_call.1} parent=1 // pred_region
      %s459 = ssub.s32 128, 128
      %460 = vsyncadd [#allocation4], %s459
      %s461 = sshll.u32 [#allocation11], 4
      %s462 = int_to_ptr.vmem [resolvable:$true] %s461
      %467 = dma.vmem_to_hbm [thread:$0]  %s462, 128, %s7, [#allocation4], 64, 64, 4
    $region53: #{tpu_custom_call.1} parent=1 // pred_fallthru
      _
    // Predicated region
    $region54: #{tpu_custom_call.1} parent=1 // pred_check
      _
    $region55: #{tpu_custom_call.1} parent=1 // pred_check_branch
      %469 = sbr.rel (0) target = $region57
    $region56: #{tpu_custom_call.1} parent=1 // pred_region
      %470 = dma.done [#allocation4], 128
    $region57: #{tpu_custom_call.1} parent=1 // pred_fallthru
      _
    %471 = vsyncpa [#allocation3], 1
    %472 = vsyncpa [#allocation6], 1
    %473 = vsyncpa [#allocation9], 1
    %474 = vsyncpa [#allocation4], 1

</llo_original>
